<compile_context>
chip_gen: v7x
topology: tpu7x:2x2x1
jax: 0.10.0
libtpu: 0.0.40
codegen_flags: <defaults>
</compile_context>

<pallas_src>
import jax
import jax.numpy as jnp
from jax import lax
from jax.experimental import pallas as pl
from jax.experimental.pallas import tpu as pltpu


def _round_up(x, m):
    return (x + m - 1) // m * m


def _mlp_kernel(x_ref, w1_ref, b1_ref, w2t_ref, b2_ref,
                w3t_ref, b3_ref, w4_ref, b4_ref, out_ref):
    # --- net[0]: Linear(d_in -> mlp_hidden) + ReLU ---------------------------
    # x streams f32 from HBM; cast to bf16 on the VPU (huge slack) so the MXU
    # runs bf16 x bf16 with f32 accumulation.
    xb = x_ref[...].astype(jnp.bfloat16)
    h1 = jnp.dot(xb, w1_ref[...], preferred_element_type=jnp.float32)
    h1 = jnp.maximum(h1 + b1_ref[...], 0.0)                       # (tile_n, H)
    # net[2]: Dropout(0.2) == identity in eval mode.

    # --- net[3]: Linear(mlp_hidden -> seq_len) + ReLU, batch-on-lanes --------
    # feaT[f, n] = sum_h w2t[f, h] * h1[n, h]   (A @ B.T, flash-attention NT form)
    feaT = lax.dot_general(
        w2t_ref[...], h1.astype(jnp.bfloat16),
        dimension_numbers=(((1,), (1,)), ((), ())),
        preferred_element_type=jnp.float32)                        # (seq_len, tile_n)
    feaT = jnp.maximum(feaT + b2_ref[...], 0.0)

    # --- predictor[0]: Linear(seq_len -> pred_hidden) + ReLU, VPU MACs -------
    # seq_len is tiny (4): broadcast multiply-accumulate over full 128-lane rows
    # instead of a barely utilized MXU pass sitting serially in the chain.
    seq_len = w3t_ref.shape[1]
    pT = b3_ref[...] + sum(w3t_ref[:, k:k + 1] * feaT[k:k + 1, :]
                           for k in range(seq_len))                # (pred_hidden, tile_n)
    pT = jnp.maximum(pT, 0.0)

    # --- predictor[2]: Linear(pred_hidden -> 1): weighted sublane reduce -----
    outT = jnp.sum(pT * w4_ref[...], axis=0, keepdims=True) + b4_ref[...]
    out_ref[0] = outT.astype(out_ref.dtype)          # lane-dense (1, tile_n) store


def mlp_forward(x, params, *, block_n=2048):
    """x: (N, seq_len, in_features) float32 -> (N, 1) float32."""
    N, seq_len, in_features = x.shape
    d_in = seq_len * in_features
    (w1, b1), (w2, b2), (w3, b3), (w4, b4) = params
    mlp_hidden = w1.shape[1]
    pred_hidden = w3.shape[1]

    # Batch tile: multiple of 8 sublanes. A 2048 x 512 f32 tile, double-buffered,
    # is 8 MiB -> fits v5e's 16 MiB default scoped VMEM; explicit limit adds headroom.
    tile_n = max(8, min(_round_up(block_n, 8), _round_up(N, 8)))
    # Keep >= 2 grid steps when there's enough work (v7x: 2 TensorCores per chip).
    if N > 256 and pl.cdiv(N, tile_n) < 2:
        tile_n = _round_up(pl.cdiv(N, 2), 8)
    num_tiles = pl.cdiv(N, tile_n)

    # x streamed as-is in f32 (no extra HBM pass); merging contiguous trailing
    # dims is metadata-only.
    x_flat = x.reshape(N, d_in)

    # One-time tiny weight prep (all weights stay VMEM-resident in the kernel).
    w1_bf16 = w1.astype(jnp.bfloat16)            # (d_in, H)
    w2t = w2.T.astype(jnp.bfloat16)              # (seq_len, H)
    b2c = b2.reshape(seq_len, 1)                 # columns broadcast over lanes
    w3t = w3.T                                   # (pred_hidden, seq_len)
    b3c = b3.reshape(pred_hidden, 1)
    w4c = w4.reshape(pred_hidden, 1)
    b4c = b4.reshape(1, 1)

    def resident(arr):
        # Full-array block, constant index -> fetched once, stays VMEM-resident.
        return pl.BlockSpec(arr.shape, lambda i, _nd=arr.ndim: (0,) * _nd)

    flops = 2 * N * (d_in * mlp_hidden + mlp_hidden * seq_len
                     + seq_len * pred_hidden + pred_hidden)
    param_bytes = sum(int(a.size) * 4 for a in (w1, b1, w2, b2, w3, b3, w4, b4))
    cost = pl.CostEstimate(
        flops=int(flops), transcendentals=0,
        bytes_accessed=int(N * d_in * 4 + N * 4 + param_bytes))

    out = pl.pallas_call(
        _mlp_kernel,
        out_shape=jax.ShapeDtypeStruct((num_tiles, 1, tile_n), jnp.float32),
        grid=(num_tiles,),
        in_specs=[
            pl.BlockSpec((tile_n, d_in), lambda i: (i, 0)),   # streamed x tiles
            resident(w1_bf16), resident(b1),
            resident(w2t), resident(b2c),
            resident(w3t), resident(b3c),
            resident(w4c), resident(b4c),
        ],
        out_specs=pl.BlockSpec((1, 1, tile_n), lambda i: (i, 0, 0)),
        compiler_params=pltpu.CompilerParams(
            dimension_semantics=("parallel",),     # shard batch tiles across TCs (v7x)
            vmem_limit_bytes=32 * 1024 * 1024,
        ),
        cost_estimate=cost,
    )(x_flat, w1_bf16, b1, w2t, b2c, w3t, b3c, w4c, b4c)

    # Rows beyond N (ragged last tile) are garbage by construction; slice them off.
    return out.reshape(-1)[:N].reshape(N, 1)


def init_params(key, seq_len, in_features, mlp_hidden, pred_hidden):
    """Deterministic synthetic params. Weights stored (in, out), biases (1, out)."""
    dims = [
        (seq_len * in_features, mlp_hidden),  # net[0]
        (mlp_hidden, seq_len),                # net[3]
        (seq_len, pred_hidden),               # predictor[0]
        (pred_hidden, 1),                     # predictor[2]
    ]
    params = []
    for (din, dout) in dims:
        key, kw, kb = jax.random.split(key, 3)
        bound = 1.0 / jnp.sqrt(din)
        w = jax.random.uniform(kw, (din, dout), jnp.float32, -bound, bound)
        b = jax.random.uniform(kb, (1, dout), jnp.float32, -bound, bound)
        params.append((w, b))
    return params


def mlp_reference(x, params):
    """Pure-JAX f32 reference of the PyTorch forward (eval mode)."""
    N = x.shape[0]
    h = x.reshape(N, -1)
    (w1, b1), (w2, b2), (w3, b3), (w4, b4) = params
    h = jnp.maximum(h @ w1 + b1, 0.0)
    h = jnp.maximum(h @ w2 + b2, 0.0)
    h = jnp.maximum(h @ w3 + b3, 0.0)
    return h @ w4 + b4


if __name__ == "__main__":
    # Small shapes consistent with the module's "(N, 4, 128)" comment,
    # scaled-down hidden sizes.
    N, SEQ_LEN, IN_FEATURES = 8, 4, 128
    MLP_HIDDEN, PRED_HIDDEN = 32, 16

    key = jax.random.PRNGKey(0)
    key, kx = jax.random.split(key)
    x = jax.random.normal(kx, (N, SEQ_LEN, IN_FEATURES), jnp.float32)
    params = init_params(key, SEQ_LEN, IN_FEATURES, MLP_HIDDEN, PRED_HIDDEN)

    out = jax.block_until_ready(mlp_forward(x, params))
    ref = mlp_reference(x, params)
    assert out.shape == (N, 1), out.shape
    # bf16 operands on the first two layers -> loosened tolerance vs f32 reference.
    assert jnp.allclose(out, ref, atol=5e-2, rtol=5e-2), \
        f"max abs err {jnp.max(jnp.abs(out - ref))}"

    # Exercise the ragged / multi-tile path (N not a multiple of the batch tile).
    N2 = 20
    key, kx2 = jax.random.split(key)
    x2 = jax.random.normal(kx2, (N2, SEQ_LEN, IN_FEATURES), jnp.float32)
    out2 = jax.block_until_ready(mlp_forward(x2, params, block_n=8))
    ref2 = mlp_reference(x2, params)
    assert out2.shape == (N2, 1), out2.shape
    assert jnp.allclose(out2, ref2, atol=5e-2, rtol=5e-2), \
        f"max abs err {jnp.max(jnp.abs(out2 - ref2))}"

    print("KERNEL_OK")
</pallas_src>

<mosaic_0001>
module attributes {stable_mosaic.version = 11 : i64} {
  func.func @_mlp_kernel(%arg0: i32, %arg1: memref<8x512xf32, #tpu.memory_space<vmem>>, %arg2: memref<512x32xbf16, #tpu.memory_space<vmem>>, %arg3: memref<1x32xf32, #tpu.memory_space<vmem>>, %arg4: memref<4x32xbf16, #tpu.memory_space<vmem>>, %arg5: memref<4x1xf32, #tpu.memory_space<vmem>>, %arg6: memref<16x4xf32, #tpu.memory_space<vmem>>, %arg7: memref<16x1xf32, #tpu.memory_space<vmem>>, %arg8: memref<16x1xf32, #tpu.memory_space<vmem>>, %arg9: memref<1x1xf32, #tpu.memory_space<vmem>>, %arg10: memref<1x1x8xf32, #tpu.memory_space<vmem>>) attributes {dimension_semantics = [#tpu.dimension_semantics<parallel>], iteration_bounds = array<i64: 1>, scalar_prefetch = 0 : i64, scratch_operands = 0 : i64, tpu.core_type = #tpu.core_type<tc>, window_params = [{transform_indices = @transform_0, window_bounds = array<i64: 8, 512>}, {pipeline_mode = #tpu.pipeline_mode<synchronous>, transform_indices = @transform_1, window_bounds = array<i64: 512, 32>}, {pipeline_mode = #tpu.pipeline_mode<synchronous>, transform_indices = @transform_2, window_bounds = array<i64: 1, 32>}, {pipeline_mode = #tpu.pipeline_mode<synchronous>, transform_indices = @transform_3, window_bounds = array<i64: 4, 32>}, {pipeline_mode = #tpu.pipeline_mode<synchronous>, transform_indices = @transform_4, window_bounds = array<i64: 4, 1>}, {pipeline_mode = #tpu.pipeline_mode<synchronous>, transform_indices = @transform_5, window_bounds = array<i64: 16, 4>}, {pipeline_mode = #tpu.pipeline_mode<synchronous>, transform_indices = @transform_6, window_bounds = array<i64: 16, 1>}, {pipeline_mode = #tpu.pipeline_mode<synchronous>, transform_indices = @transform_7, window_bounds = array<i64: 16, 1>}, {pipeline_mode = #tpu.pipeline_mode<synchronous>, transform_indices = @transform_8, window_bounds = array<i64: 1, 1>}, {transform_indices = @transform_9, window_bounds = array<i64: 1, 1, 8>}]} {
    %c0 = arith.constant 0 : index
    %c0_0 = arith.constant 0 : index
    %0 = vector.load %arg1[%c0, %c0_0] : memref<8x512xf32, #tpu.memory_space<vmem>>, vector<8x512xf32>
    %1 = arith.truncf %0 : vector<8x512xf32> to vector<8x512xbf16>
    %c0_1 = arith.constant 0 : index
    %c0_2 = arith.constant 0 : index
    %2 = vector.load %arg2[%c0_1, %c0_2] : memref<512x32xbf16, #tpu.memory_space<vmem>>, vector<512x32xbf16>
    %cst = arith.constant dense<0.000000e+00> : vector<8x32xf32>
    %3 = tpu.matmul %1, %2, %cst {dimension_numbers = #tpu.dot_dimension_numbers<[1], [0], [0], [1], [0, 0, 1, 1], [], []>} : vector<8x512xbf16>, vector<512x32xbf16>, vector<8x32xf32> -> vector<8x32xf32>
    %c0_3 = arith.constant 0 : index
    %c0_4 = arith.constant 0 : index
    %4 = vector.load %arg3[%c0_3, %c0_4] : memref<1x32xf32, #tpu.memory_space<vmem>>, vector<1x32xf32>
    %5 = vector.broadcast %4 : vector<1x32xf32> to vector<8x32xf32>
    %6 = arith.addf %3, %5 : vector<8x32xf32>
    %cst_5 = arith.constant 0.000000e+00 : f32
    %7 = vector.broadcast %cst_5 : f32 to vector<8x32xf32>
    %8 = arith.maximumf %6, %7 : vector<8x32xf32>
    %c0_6 = arith.constant 0 : index
    %c0_7 = arith.constant 0 : index
    %9 = vector.load %arg4[%c0_6, %c0_7] : memref<4x32xbf16, #tpu.memory_space<vmem>>, vector<4x32xbf16>
    %10 = arith.truncf %8 : vector<8x32xf32> to vector<8x32xbf16>
    %cst_8 = arith.constant dense<0.000000e+00> : vector<4x8xf32>
    %11 = tpu.matmul %9, %10, %cst_8 {dimension_numbers = #tpu.dot_dimension_numbers<[1], [1], [0], [0], [0, 0, 1, 0], [], []>} : vector<4x32xbf16>, vector<8x32xbf16>, vector<4x8xf32> -> vector<4x8xf32>
    %c0_9 = arith.constant 0 : index
    %c0_10 = arith.constant 0 : index
    %12 = vector.load %arg5[%c0_9, %c0_10] : memref<4x1xf32, #tpu.memory_space<vmem>>, vector<4x1xf32>
    %13 = vector.broadcast %12 : vector<4x1xf32> to vector<4x8xf32>
    %14 = arith.addf %11, %13 : vector<4x8xf32>
    %cst_11 = arith.constant 0.000000e+00 : f32
    %15 = vector.broadcast %cst_11 : f32 to vector<4x8xf32>
    %16 = arith.maximumf %14, %15 : vector<4x8xf32>
    %c0_12 = arith.constant 0 : index
    %c0_13 = arith.constant 0 : index
    %17 = vector.load %arg7[%c0_12, %c0_13] : memref<16x1xf32, #tpu.memory_space<vmem>>, vector<16x1xf32>
    %c0_14 = arith.constant 0 : index
    %c0_15 = arith.constant 0 : index
    %18 = vector.load %arg6[%c0_14, %c0_15] : memref<16x4xf32, #tpu.memory_space<vmem>>, vector<16x1xf32>
    %19 = vector.extract_strided_slice %16 {offsets = [0, 0], sizes = [1, 8], strides = [1, 1]} : vector<4x8xf32> to vector<1x8xf32>
    %20 = vector.broadcast %18 : vector<16x1xf32> to vector<16x8xf32>
    %21 = vector.broadcast %19 : vector<1x8xf32> to vector<16x8xf32>
    %22 = arith.mulf %20, %21 : vector<16x8xf32>
    %cst_16 = arith.constant 0.000000e+00 : f32
    %23 = vector.broadcast %cst_16 : f32 to vector<16x8xf32>
    %24 = arith.addf %23, %22 : vector<16x8xf32>
    %c0_17 = arith.constant 0 : index
    %c1 = arith.constant 1 : index
    %25 = vector.load %arg6[%c0_17, %c1] : memref<16x4xf32, #tpu.memory_space<vmem>>, vector<16x1xf32>
    %26 = vector.extract_strided_slice %16 {offsets = [1, 0], sizes = [1, 8], strides = [1, 1]} : vector<4x8xf32> to vector<1x8xf32>
    %27 = vector.broadcast %25 : vector<16x1xf32> to vector<16x8xf32>
    %28 = vector.broadcast %26 : vector<1x8xf32> to vector<16x8xf32>
    %29 = arith.mulf %27, %28 : vector<16x8xf32>
    %30 = arith.addf %24, %29 : vector<16x8xf32>
    %c0_18 = arith.constant 0 : index
    %c2 = arith.constant 2 : index
    %31 = vector.load %arg6[%c0_18, %c2] : memref<16x4xf32, #tpu.memory_space<vmem>>, vector<16x1xf32>
    %32 = vector.extract_strided_slice %16 {offsets = [2, 0], sizes = [1, 8], strides = [1, 1]} : vector<4x8xf32> to vector<1x8xf32>
    %33 = vector.broadcast %31 : vector<16x1xf32> to vector<16x8xf32>
    %34 = vector.broadcast %32 : vector<1x8xf32> to vector<16x8xf32>
    %35 = arith.mulf %33, %34 : vector<16x8xf32>
    %36 = arith.addf %30, %35 : vector<16x8xf32>
    %c0_19 = arith.constant 0 : index
    %c3 = arith.constant 3 : index
    %37 = vector.load %arg6[%c0_19, %c3] : memref<16x4xf32, #tpu.memory_space<vmem>>, vector<16x1xf32>
    %38 = vector.extract_strided_slice %16 {offsets = [3, 0], sizes = [1, 8], strides = [1, 1]} : vector<4x8xf32> to vector<1x8xf32>
    %39 = vector.broadcast %37 : vector<16x1xf32> to vector<16x8xf32>
    %40 = vector.broadcast %38 : vector<1x8xf32> to vector<16x8xf32>
    %41 = arith.mulf %39, %40 : vector<16x8xf32>
    %42 = arith.addf %36, %41 : vector<16x8xf32>
    %43 = vector.broadcast %17 : vector<16x1xf32> to vector<16x8xf32>
    %44 = arith.addf %43, %42 : vector<16x8xf32>
    %cst_20 = arith.constant 0.000000e+00 : f32
    %45 = vector.broadcast %cst_20 : f32 to vector<16x8xf32>
    %46 = arith.maximumf %44, %45 : vector<16x8xf32>
    %c0_21 = arith.constant 0 : index
    %c0_22 = arith.constant 0 : index
    %47 = vector.load %arg8[%c0_21, %c0_22] : memref<16x1xf32, #tpu.memory_space<vmem>>, vector<16x1xf32>
    %48 = vector.broadcast %47 : vector<16x1xf32> to vector<16x8xf32>
    %49 = arith.mulf %46, %48 : vector<16x8xf32>
    %cst_23 = arith.constant dense<0.000000e+00> : vector<8xf32>
    %50 = vector.multi_reduction <add>, %49, %cst_23 [0] : vector<16x8xf32> to vector<8xf32>
    %51 = vector.shape_cast %50 : vector<8xf32> to vector<1x8xf32>
    %c0_24 = arith.constant 0 : index
    %c0_25 = arith.constant 0 : index
    %52 = vector.load %arg9[%c0_24, %c0_25] : memref<1x1xf32, #tpu.memory_space<vmem>>, vector<1x1xf32>
    %53 = vector.broadcast %52 : vector<1x1xf32> to vector<1x8xf32>
    %54 = arith.addf %51, %53 : vector<1x8xf32>
    %c0_26 = arith.constant 0 : index
    %c0_27 = arith.constant 0 : index
    %c0_28 = arith.constant 0 : index
    %55 = vector.load %arg10[%c0_26, %c0_27, %c0_28] : memref<1x1x8xf32, #tpu.memory_space<vmem>>, vector<1x1x8xf32>
    %56 = vector.shape_cast %55 : vector<1x1x8xf32> to vector<1x8xf32>
    %57 = vector.shape_cast %54 : vector<1x8xf32> to vector<1x1x8xf32>
    tpu.vector_store %arg10[%c0_26, %c0_27, %c0_28], %57 {strides = array<i32>} : memref<1x1x8xf32, #tpu.memory_space<vmem>>, vector<1x1x8xf32>,
    return
  }
  func.func @transform_0(%arg0: i32) -> (i32, i32) {
    %c0_i32 = arith.constant 0 : i32
    %c0_i32_0 = arith.constant 0 : i32
    return %arg0, %c0_i32 : i32, i32
  }
  func.func @transform_1(%arg0: i32) -> (i32, i32) {
    %c0_i32 = arith.constant 0 : i32
    %c0_i32_0 = arith.constant 0 : i32
    %c0_i32_1 = arith.constant 0 : i32
    return %c0_i32, %c0_i32_0 : i32, i32
  }
  func.func @transform_2(%arg0: i32) -> (i32, i32) {
    %c0_i32 = arith.constant 0 : i32
    %c0_i32_0 = arith.constant 0 : i32
    %c0_i32_1 = arith.constant 0 : i32
    return %c0_i32, %c0_i32_0 : i32, i32
  }
  func.func @transform_3(%arg0: i32) -> (i32, i32) {
    %c0_i32 = arith.constant 0 : i32
    %c0_i32_0 = arith.constant 0 : i32
    %c0_i32_1 = arith.constant 0 : i32
    return %c0_i32, %c0_i32_0 : i32, i32
  }
  func.func @transform_4(%arg0: i32) -> (i32, i32) {
    %c0_i32 = arith.constant 0 : i32
    %c0_i32_0 = arith.constant 0 : i32
    %c0_i32_1 = arith.constant 0 : i32
    return %c0_i32, %c0_i32_0 : i32, i32
  }
  func.func @transform_5(%arg0: i32) -> (i32, i32) {
    %c0_i32 = arith.constant 0 : i32
    %c0_i32_0 = arith.constant 0 : i32
    %c0_i32_1 = arith.constant 0 : i32
    return %c0_i32, %c0_i32_0 : i32, i32
  }
  func.func @transform_6(%arg0: i32) -> (i32, i32) {
    %c0_i32 = arith.constant 0 : i32
    %c0_i32_0 = arith.constant 0 : i32
    %c0_i32_1 = arith.constant 0 : i32
    return %c0_i32, %c0_i32_0 : i32, i32
  }
  func.func @transform_7(%arg0: i32) -> (i32, i32) {
    %c0_i32 = arith.constant 0 : i32
    %c0_i32_0 = arith.constant 0 : i32
    %c0_i32_1 = arith.constant 0 : i32
    return %c0_i32, %c0_i32_0 : i32, i32
  }
  func.func @transform_8(%arg0: i32) -> (i32, i32) {
    %c0_i32 = arith.constant 0 : i32
    %c0_i32_0 = arith.constant 0 : i32
    %c0_i32_1 = arith.constant 0 : i32
    return %c0_i32, %c0_i32_0 : i32, i32
  }
  func.func @transform_9(%arg0: i32) -> (i32, i32, i32) {
    %c0_i32 = arith.constant 0 : i32
    %c0_i32_0 = arith.constant 0 : i32
    %c0_i32_1 = arith.constant 0 : i32
    return %arg0, %c0_i32, %c0_i32_0 : i32, i32, i32
  }
}

</mosaic_0001>

<llo_original>
// kernel: tpu_custom_call.1
$region0: #{tpu_custom_call.1}
  #allocation0 [shape = 'u32[]', space=smem, size = 0x4, offset = 0x4, fixed_abs, tag = 'smem constant byte address 0x4 - core index']
  #allocation1 [shape = 'u32[144,128]{1,0:T(1,128)}', space=vmem, size = 0x12000, scoped, tag = 'internal scratch']
  #allocation2 [shape = 'f32[1,1]{1,0:T(1,128)S(1)}', space=vmem, size = 0x200, scoped, tag = 'scoped memory for tpu_custom_call.1']
  %s0 = inlined_call_operand.vmem [shape: f32[8,512], index: 0, kind: input, shape index: {}]
  %s1 = inlined_call_operand.vmem [shape: bf16[512,32], index: 1, kind: input, shape index: {}]
  %s2 = inlined_call_operand.vmem [shape: f32[1,32], index: 2, kind: input, shape index: {}]
  %s3 = inlined_call_operand.vmem [shape: bf16[4,32], index: 3, kind: input, shape index: {}]
  %s4 = inlined_call_operand.vmem [shape: f32[4,1], index: 4, kind: input, shape index: {}]
  %s5 = inlined_call_operand.vmem [shape: f32[16,4], index: 5, kind: input, shape index: {}]
  %s6 = inlined_call_operand.vmem [shape: f32[16,1], index: 6, kind: input, shape index: {}]
  %s7 = inlined_call_operand.vmem [shape: f32[16,1], index: 7, kind: input, shape index: {}]
  %s8 = inlined_call_operand.<no memory space> [shape: f32[1,1], index: 8, kind: input, shape index: {}]
  %s9 = inlined_call_operand.hbm [shape: f32[1,1,8], index: 9, kind: output, shape index: {}]
  %s10 = sld [smem:[#allocation0]]
  $region46: #{tpu_custom_call.1} parent=0
    _
  %s12 = ssub.s32 1, %s10
  %s13 = scalar_select 0, %s12, %s10
  %v14 = vstv %s8
  %15 = vst [vmem:[#allocation2] sm:$0x1] %v14
  $region1: #{tpu_custom_call.1} parent=0
    #allocation3 [shape = 'u8[512]{0}', space=vmem, size = 0x400, scoped, tag = 'output window, operand 0, single buffered']
    #allocation4 [shape = 's32[1]{0}', space=sflag, size = 0x4, scoped, tag = 'scoped memory for tpu_custom_call.1']
    %16 = vsyncpa [#allocation4], 0
    // Predicated region
    $region2: #{tpu_custom_call.1} parent=1 // pred_check
      _
    $region3: #{tpu_custom_call.1} parent=1 // pred_check_branch
      %18 = sbr.rel (0) target = $region5
    $region4: #{tpu_custom_call.1} parent=1 // pred_region
      _
    $region5: #{tpu_custom_call.1} parent=1 // pred_fallthru
      _
    // Predicated region
    $region6: #{tpu_custom_call.1} parent=1 // pred_check
      _
    $region7: #{tpu_custom_call.1} parent=1 // pred_check_branch
      %20 = sbr.rel (0) target = $region9
    $region8: #{tpu_custom_call.1} parent=1 // pred_region
      _
    $region9: #{tpu_custom_call.1} parent=1 // pred_fallthru
      _
    // Predicated region
    $region10: #{tpu_custom_call.1} parent=1 // pred_check
      _
    $region11: #{tpu_custom_call.1} parent=1 // pred_check_branch
      %22 = sbr.rel (0) target = $region13
    $region12: #{tpu_custom_call.1} parent=1 // pred_region
      _
    $region13: #{tpu_custom_call.1} parent=1 // pred_fallthru
      _
    // Predicated region
    $region14: #{tpu_custom_call.1} parent=1 // pred_check
      _
    $region15: #{tpu_custom_call.1} parent=1 // pred_check_branch
      %24 = sbr.rel (0) target = $region17
    $region16: #{tpu_custom_call.1} parent=1 // pred_region
      _
    $region17: #{tpu_custom_call.1} parent=1 // pred_fallthru
      _
    // Predicated region
    $region18: #{tpu_custom_call.1} parent=1 // pred_check
      _
    $region19: #{tpu_custom_call.1} parent=1 // pred_check_branch
      %26 = sbr.rel (0) target = $region21
    $region20: #{tpu_custom_call.1} parent=1 // pred_region
      _
    $region21: #{tpu_custom_call.1} parent=1 // pred_fallthru
      _
    // Predicated region
    $region22: #{tpu_custom_call.1} parent=1 // pred_check
      _
    $region23: #{tpu_custom_call.1} parent=1 // pred_check_branch
      %28 = sbr.rel (0) target = $region25
    $region24: #{tpu_custom_call.1} parent=1 // pred_region
      _
    $region25: #{tpu_custom_call.1} parent=1 // pred_fallthru
      _
    // Predicated region
    $region26: #{tpu_custom_call.1} parent=1 // pred_check
      _
    $region27: #{tpu_custom_call.1} parent=1 // pred_check_branch
      %30 = sbr.rel (0) target = $region29
    $region28: #{tpu_custom_call.1} parent=1 // pred_region
      _
    $region29: #{tpu_custom_call.1} parent=1 // pred_fallthru
      _
    // Predicated region
    $region30: #{tpu_custom_call.1} parent=1 // pred_check
      _
    $region31: #{tpu_custom_call.1} parent=1 // pred_check_branch
      %32 = sbr.rel (0) target = $region33
    $region32: #{tpu_custom_call.1} parent=1 // pred_region
      _
    $region33: #{tpu_custom_call.1} parent=1 // pred_fallthru
      _
    // Predicated region
    $region34: #{tpu_custom_call.1} parent=1 // pred_check
      _
    $region35: #{tpu_custom_call.1} parent=1 // pred_check_branch
      %34 = sbr.rel (0) target = $region37
    $region36: #{tpu_custom_call.1} parent=1 // pred_region
      _
    $region37: #{tpu_custom_call.1} parent=1 // pred_fallthru
      _
    %v36 = vld [vmem:[%s0] sm:$0xff]
    %v37 = vld [vmem:[%s0 + $0x8] sm:$0xff]
    %v38 = vld [vmem:[%s0 + $0x10] sm:$0xff]
    %v39 = vld [vmem:[%s0 + $0x18] sm:$0xff]
    %v40 = vpack.c.bf16 %v36, %v36
    %v41 = vpack.c.bf16 %v37, %v37
    %v42 = vpack.c.bf16 %v38, %v38
    %v43 = vpack.c.bf16 %v39, %v39
    %v44 = vld [vmem:[%s1] sm:$0xf]
    %v45 = vld [vmem:[%s1 + $0x4] sm:$0xf]
    %v46 = vld [vmem:[%s1 + $0x8] sm:$0xf]
    %v47 = vld [vmem:[%s1 + $0xc] sm:$0xf]
    %v48 = vld [vmem:[%s1 + $0x10] sm:$0xf]
    %v49 = vld [vmem:[%s1 + $0x14] sm:$0xf]
    %v50 = vld [vmem:[%s1 + $0x18] sm:$0xf]
    %v51 = vld [vmem:[%s1 + $0x1c] sm:$0xf]
    %v52 = vld [vmem:[%s1 + $0x20] sm:$0xf]
    %v53 = vld [vmem:[%s1 + $0x24] sm:$0xf]
    %v54 = vld [vmem:[%s1 + $0x28] sm:$0xf]
    %v55 = vld [vmem:[%s1 + $0x2c] sm:$0xf]
    %v56 = vld [vmem:[%s1 + $0x30] sm:$0xf]
    %v57 = vld [vmem:[%s1 + $0x34] sm:$0xf]
    %v58 = vld [vmem:[%s1 + $0x38] sm:$0xf]
    %v59 = vld [vmem:[%s1 + $0x3c] sm:$0xf]
    %v60 = vld [vmem:[%s1 + $0x40] sm:$0xf]
    %v61 = vld [vmem:[%s1 + $0x44] sm:$0xf]
    %v62 = vld [vmem:[%s1 + $0x48] sm:$0xf]
    %v63 = vld [vmem:[%s1 + $0x4c] sm:$0xf]
    %v64 = vld [vmem:[%s1 + $0x50] sm:$0xf]
    %v65 = vld [vmem:[%s1 + $0x54] sm:$0xf]
    %v66 = vld [vmem:[%s1 + $0x58] sm:$0xf]
    %v67 = vld [vmem:[%s1 + $0x5c] sm:$0xf]
    %v68 = vld [vmem:[%s1 + $0x60] sm:$0xf]
    %v69 = vld [vmem:[%s1 + $0x64] sm:$0xf]
    %v70 = vld [vmem:[%s1 + $0x68] sm:$0xf]
    %v71 = vld [vmem:[%s1 + $0x6c] sm:$0xf]
    %v72 = vld [vmem:[%s1 + $0x70] sm:$0xf]
    %v73 = vld [vmem:[%s1 + $0x74] sm:$0xf]
    %v74 = vld [vmem:[%s1 + $0x78] sm:$0xf]
    %v75 = vld [vmem:[%s1 + $0x7c] sm:$0xf]
    %v76 = vld [vmem:[%s1 + $0x80] sm:$0xf]
    %v77 = vld [vmem:[%s1 + $0x84] sm:$0xf]
    %v78 = vld [vmem:[%s1 + $0x88] sm:$0xf]
    %v79 = vld [vmem:[%s1 + $0x8c] sm:$0xf]
    %v80 = vld [vmem:[%s1 + $0x90] sm:$0xf]
    %v81 = vld [vmem:[%s1 + $0x94] sm:$0xf]
    %v82 = vld [vmem:[%s1 + $0x98] sm:$0xf]
    %v83 = vld [vmem:[%s1 + $0x9c] sm:$0xf]
    %v84 = vld [vmem:[%s1 + $0xa0] sm:$0xf]
    %v85 = vld [vmem:[%s1 + $0xa4] sm:$0xf]
    %v86 = vld [vmem:[%s1 + $0xa8] sm:$0xf]
    %v87 = vld [vmem:[%s1 + $0xac] sm:$0xf]
    %v88 = vld [vmem:[%s1 + $0xb0] sm:$0xf]
    %v89 = vld [vmem:[%s1 + $0xb4] sm:$0xf]
    %v90 = vld [vmem:[%s1 + $0xb8] sm:$0xf]
    %v91 = vld [vmem:[%s1 + $0xbc] sm:$0xf]
    %v92 = vld [vmem:[%s1 + $0xc0] sm:$0xf]
    %v93 = vld [vmem:[%s1 + $0xc4] sm:$0xf]
    %v94 = vld [vmem:[%s1 + $0xc8] sm:$0xf]
    %v95 = vld [vmem:[%s1 + $0xcc] sm:$0xf]
    %v96 = vld [vmem:[%s1 + $0xd0] sm:$0xf]
    %v97 = vld [vmem:[%s1 + $0xd4] sm:$0xf]
    %v98 = vld [vmem:[%s1 + $0xd8] sm:$0xf]
    %v99 = vld [vmem:[%s1 + $0xdc] sm:$0xf]
    %v100 = vld [vmem:[%s1 + $0xe0] sm:$0xf]
    %v101 = vld [vmem:[%s1 + $0xe4] sm:$0xf]
    %v102 = vld [vmem:[%s1 + $0xe8] sm:$0xf]
    %v103 = vld [vmem:[%s1 + $0xec] sm:$0xf]
    %v104 = vld [vmem:[%s1 + $0xf0] sm:$0xf]
    %v105 = vld [vmem:[%s1 + $0xf4] sm:$0xf]
    %v106 = vld [vmem:[%s1 + $0xf8] sm:$0xf]
    %v107 = vld [vmem:[%s1 + $0xfc] sm:$0xf]
    %v108 = vld [vmem:[%s2] sm:$0x1]
    %v110 = vlaneseq
    %v111 = vshrl.u32 %v110, 7
    %v112 = vsub.s32 0, %v111
    %v113 = vrot.slane %v108, %v112
    %v179 = vunpack.c.l.b16 %v44
    %v180 = vunpack.c.l.b16 %v45
    %v181 = vunpack.c.l.b16 %v46
    %v182 = vunpack.c.l.b16 %v47
    %v183 = vunpack.c.l.b16 %v48
    %v184 = vunpack.c.l.b16 %v49
    %v185 = vunpack.c.l.b16 %v50
    %v186 = vunpack.c.l.b16 %v51
    %v187 = vunpack.c.l.b16 %v52
    %v188 = vunpack.c.l.b16 %v53
    %v189 = vunpack.c.l.b16 %v54
    %v190 = vunpack.c.l.b16 %v55
    %v191 = vunpack.c.l.b16 %v56
    %v192 = vunpack.c.l.b16 %v57
    %v193 = vunpack.c.l.b16 %v58
    %v194 = vunpack.c.l.b16 %v59
    %v195 = vunpack.c.l.b16 %v60
    %v196 = vunpack.c.l.b16 %v61
    %v197 = vunpack.c.l.b16 %v62
    %v198 = vunpack.c.l.b16 %v63
    %v199 = vunpack.c.l.b16 %v64
    %v200 = vunpack.c.l.b16 %v65
    %v201 = vunpack.c.l.b16 %v66
    %v202 = vunpack.c.l.b16 %v67
    %v203 = vunpack.c.l.b16 %v68
    %v204 = vunpack.c.l.b16 %v69
    %v205 = vunpack.c.l.b16 %v70
    %v206 = vunpack.c.l.b16 %v71
    %v207 = vunpack.c.l.b16 %v72
    %v208 = vunpack.c.l.b16 %v73
    %v209 = vunpack.c.l.b16 %v74
    %v210 = vunpack.c.l.b16 %v75
    %v211 = vunpack.c.l.b16 %v76
    %v212 = vunpack.c.l.b16 %v77
    %v213 = vunpack.c.l.b16 %v78
    %v214 = vunpack.c.l.b16 %v79
    %v215 = vunpack.c.l.b16 %v80
    %v216 = vunpack.c.l.b16 %v81
    %v217 = vunpack.c.l.b16 %v82
    %v218 = vunpack.c.l.b16 %v83
    %v219 = vunpack.c.l.b16 %v84
    %v220 = vunpack.c.l.b16 %v85
    %v221 = vunpack.c.l.b16 %v86
    %v222 = vunpack.c.l.b16 %v87
    %v223 = vunpack.c.l.b16 %v88
    %v224 = vunpack.c.l.b16 %v89
    %v225 = vunpack.c.l.b16 %v90
    %v226 = vunpack.c.l.b16 %v91
    %v227 = vunpack.c.l.b16 %v92
    %v228 = vunpack.c.l.b16 %v93
    %v229 = vunpack.c.l.b16 %v94
    %v230 = vunpack.c.l.b16 %v95
    %v231 = vunpack.c.l.b16 %v96
    %v232 = vunpack.c.l.b16 %v97
    %v233 = vunpack.c.l.b16 %v98
    %v234 = vunpack.c.l.b16 %v99
    %v235 = vunpack.c.l.b16 %v100
    %v236 = vunpack.c.l.b16 %v101
    %v237 = vunpack.c.l.b16 %v102
    %v238 = vunpack.c.l.b16 %v103
    %v239 = vunpack.c.l.b16 %v104
    %v240 = vunpack.c.l.b16 %v105
    %v241 = vunpack.c.l.b16 %v106
    %v242 = vunpack.c.l.b16 %v107
    %v243 = vpack.c.b16 %v180, %v179
    %v244 = vpack.c.b16 %v182, %v181
    %v245 = vpack.c.b16 %v184, %v183
    %v246 = vpack.c.b16 %v186, %v185
    %v247 = vpack.c.b16 %v188, %v187
    %v248 = vpack.c.b16 %v190, %v189
    %v249 = vpack.c.b16 %v192, %v191
    %v250 = vpack.c.b16 %v194, %v193
    %v251 = vpack.c.b16 %v196, %v195
    %v252 = vpack.c.b16 %v198, %v197
    %v253 = vpack.c.b16 %v200, %v199
    %v254 = vpack.c.b16 %v202, %v201
    %v255 = vpack.c.b16 %v204, %v203
    %v256 = vpack.c.b16 %v206, %v205
    %v257 = vpack.c.b16 %v208, %v207
    %v258 = vpack.c.b16 %v210, %v209
    %v259 = vpack.c.b16 %v212, %v211
    %v260 = vpack.c.b16 %v214, %v213
    %v261 = vpack.c.b16 %v216, %v215
    %v262 = vpack.c.b16 %v218, %v217
    %v263 = vpack.c.b16 %v220, %v219
    %v264 = vpack.c.b16 %v222, %v221
    %v265 = vpack.c.b16 %v224, %v223
    %v266 = vpack.c.b16 %v226, %v225
    %v267 = vpack.c.b16 %v228, %v227
    %v268 = vpack.c.b16 %v230, %v229
    %v269 = vpack.c.b16 %v232, %v231
    %v270 = vpack.c.b16 %v234, %v233
    %v271 = vpack.c.b16 %v236, %v235
    %v272 = vpack.c.b16 %v238, %v237
    %v273 = vpack.c.b16 %v240, %v239
    %v274 = vpack.c.b16 %v242, %v241
    %307 = vmatprep.subr.bf16.mxu0 0
    %308 = vmatpush1.bf16.msra.mxu0 %v243
    %309 = vmatprep.subr.bf16.mxu0 0
    %310 = vmatpush1.bf16.msra.mxu0 %v244
    %311 = vmatprep.subr.bf16.mxu0 0
    %312 = vmatpush1.bf16.msra.mxu0 %v245
    %313 = vmatprep.subr.bf16.mxu0 0
    %314 = vmatpush1.bf16.msra.mxu0 %v246
    %315 = vmatprep.subr.bf16.mxu0 0
    %316 = vmatpush1.bf16.msra.mxu0 %v247
    %317 = vmatprep.subr.bf16.mxu0 0
    %318 = vmatpush1.bf16.msra.mxu0 %v248
    %319 = vmatprep.subr.bf16.mxu0 0
    %320 = vmatpush1.bf16.msra.mxu0 %v249
    %321 = vmatprep.subr.bf16.mxu0 0
    %322 = vmatpush1.bf16.msra.mxu0 %v250
    %323 = vmatprep.subr.bf16.mxu0 0
    %324 = vmatpush1.bf16.msra.mxu0 %v251
    %325 = vmatprep.subr.bf16.mxu0 0
    %326 = vmatpush1.bf16.msra.mxu0 %v252
    %327 = vmatprep.subr.bf16.mxu0 0
    %328 = vmatpush1.bf16.msra.mxu0 %v253
    %329 = vmatprep.subr.bf16.mxu0 0
    %330 = vmatpush1.bf16.msra.mxu0 %v254
    %331 = vmatprep.subr.bf16.mxu0 0
    %332 = vmatpush1.bf16.msra.mxu0 %v255
    %333 = vmatprep.subr.bf16.mxu0 0
    %334 = vmatpush1.bf16.msra.mxu0 %v256
    %335 = vmatprep.subr.bf16.mxu0 0
    %336 = vmatpush1.bf16.msra.mxu0 %v257
    %337 = vmatprep.subr.bf16.mxu0 0
    %338 = vmatpush1.bf16.msra.mxu0 %v258
    %339 = vmatprep.mubr.bf16.mxu0 %v41
    %340 = vmatmul.mubr.bf16.gmra.mrb[0].mxu0 %v40
    %v341 = vpop.f32.mrb[0].mxu0
    %v342 = vadd.f32 %v113, %v341
    %v343 = vpop.f32.mrb[0].mxu0
    %v344 = vpop.f32.mrb[0].mxu0
    %v345 = vpop.f32.mrb[0].mxu0
    %346 = vdwg.mxu0
    %347 = vmatprep.subr.bf16.mxu0 0
    %348 = vmatpush1.bf16.msra.mxu0 %v259
    %349 = vmatprep.subr.bf16.mxu0 0
    %350 = vmatpush1.bf16.msra.mxu0 %v260
    %351 = vmatprep.subr.bf16.mxu0 0
    %352 = vmatpush1.bf16.msra.mxu0 %v261
    %353 = vmatprep.subr.bf16.mxu0 0
    %354 = vmatpush1.bf16.msra.mxu0 %v262
    %355 = vmatprep.subr.bf16.mxu0 0
    %356 = vmatpush1.bf16.msra.mxu0 %v263
    %357 = vmatprep.subr.bf16.mxu0 0
    %358 = vmatpush1.bf16.msra.mxu0 %v264
    %359 = vmatprep.subr.bf16.mxu0 0
    %360 = vmatpush1.bf16.msra.mxu0 %v265
    %361 = vmatprep.subr.bf16.mxu0 0
    %362 = vmatpush1.bf16.msra.mxu0 %v266
    %363 = vmatprep.subr.bf16.mxu0 0
    %364 = vmatpush1.bf16.msra.mxu0 %v267
    %365 = vmatprep.subr.bf16.mxu0 0
    %366 = vmatpush1.bf16.msra.mxu0 %v268
    %367 = vmatprep.subr.bf16.mxu0 0
    %368 = vmatpush1.bf16.msra.mxu0 %v269
    %369 = vmatprep.subr.bf16.mxu0 0
    %370 = vmatpush1.bf16.msra.mxu0 %v270
    %371 = vmatprep.subr.bf16.mxu0 0
    %372 = vmatpush1.bf16.msra.mxu0 %v271
    %373 = vmatprep.subr.bf16.mxu0 0
    %374 = vmatpush1.bf16.msra.mxu0 %v272
    %375 = vmatprep.subr.bf16.mxu0 0
    %376 = vmatpush1.bf16.msra.mxu0 %v273
    %377 = vmatprep.subr.bf16.mxu0 0
    %378 = vmatpush1.bf16.msra.mxu0 %v274
    %379 = vmatprep.mubr.bf16.mxu0 %v43
    %380 = vmatmul.mubr.bf16.gmra.mrb[0].mxu0 %v42
    %v381 = vpop.f32.mrb[0].mxu0
    %v382 = vadd.f32 %v342, %v381
    %v383 = vpop.f32.mrb[0].mxu0
    %v384 = vpop.f32.mrb[0].mxu0
    %v385 = vpop.f32.mrb[0].mxu0
    %386 = vdwg.mxu0
    %v387 = vmax.f32 %v382, 0.0
    %v388 = vld [vmem:[%s3] sm:$0x3]
    %v389 = vpack.c.bf16 %v387, %v387
    %v390 = vld [vmem:[%s4] sm:$0xf]
    %392 = vset.pattern.permute.xlu0 0
    %393 = vperm.xlu0 %392, %v390
    %v394 = vpop.permute.xlu0 %393
    %vm396 = vcmask 261120
    %v398 = vsel %vm396, %v388, 0
    %v401 = vsel %vm396, %v389, 0
    %403 = vmatprep.subr.bf16.mxu0 0
    %404 = vmatpush1.bf16.xpose.msra.mxu0 %v401
    %405 = vmatprep.subr.bf16.mxu0 0
    %406 = vmatpush1.bf16.xpose.msra.mxu0 0
    %407 = vmatprep.subr.bf16.mxu0 0
    %408 = vmatpush1.bf16.xpose.msra.mxu0 0
    %409 = vmatprep.subr.bf16.mxu0 0
    %410 = vmatpush1.bf16.xpose.msra.mxu0 0
    %411 = vmatprep.subr.bf16.mxu0 0
    %412 = vmatpush1.bf16.xpose.msra.mxu0 0
    %413 = vmatprep.subr.bf16.mxu0 0
    %414 = vmatpush1.bf16.xpose.msra.mxu0 0
    %415 = vmatprep.subr.bf16.mxu0 0
    %416 = vmatpush1.bf16.xpose.msra.mxu0 0
    %417 = vmatprep.subr.bf16.mxu0 0
    %418 = vmatpush1.bf16.xpose.msra.mxu0 0
    %419 = vmatprep.subr.bf16.mxu0 0
    %420 = vmatpush1.bf16.xpose.msra.mxu0 0
    %421 = vmatprep.subr.bf16.mxu0 0
    %422 = vmatpush1.bf16.xpose.msra.mxu0 0
    %423 = vmatprep.subr.bf16.mxu0 0
    %424 = vmatpush1.bf16.xpose.msra.mxu0 0
    %425 = vmatprep.subr.bf16.mxu0 0
    %426 = vmatpush1.bf16.xpose.msra.mxu0 0
    %427 = vmatprep.subr.bf16.mxu0 0
    %428 = vmatpush1.bf16.xpose.msra.mxu0 0
    %429 = vmatprep.subr.bf16.mxu0 0
    %430 = vmatpush1.bf16.xpose.msra.mxu0 0
    %431 = vmatprep.subr.bf16.mxu0 0
    %432 = vmatpush1.bf16.xpose.msra.mxu0 0
    %433 = vmatprep.subr.bf16.mxu0 0
    %434 = vmatpush1.bf16.xpose.msra.mxu0 0
    %435 = vmatprep.mubr.bf16.mxu0 0
    %436 = vmatmul.mubr.bf16.gmra.mrb[0].mxu0 %v398
    %v437 = vpop.f32.mrb[0].mxu0
    %v438 = vadd.f32 %v394, %v437
    %v439 = vpop.f32.mrb[0].mxu0
    %v440 = vpop.f32.mrb[0].mxu0
    %v441 = vpop.f32.mrb[0].mxu0
    %442 = vdwg.mxu0
    %v443 = vmax.f32 %v438, 0.0
    %v444 = vld [vmem:[%s6] sm:$0xff]
    %v445 = vld [vmem:[%s6 + $0x8] sm:$0xff]
    %v446 = vld [vmem:[%s5] sm:$0xff]
    %v447 = vld [vmem:[%s5 + $0x8] sm:$0xff]
    %449 = vset.pattern.permute.xlu0 0
    %450 = vperm.xlu0 %449, %v446
    %v451 = vpop.permute.xlu0 %450
    %454 = vset.pattern.permute.xlu0 0
    %455 = vperm.xlu0 %454, %v447
    %v456 = vpop.permute.xlu0 %455
    %v458 = vlaneseq
    %v459 = vshrl.u32 %v458, 7
    %v460 = vsub.s32 0, %v459
    %v461 = vrot.slane %v443, %v460
    %v462 = vmul.f32 %v451, %v461
    %v463 = vmul.f32 %v456, %v461
    %v464 = vadd.f32 %v462, 0.0
    %v465 = vadd.f32 %v463, 0.0
    %466 = vset.pattern.permute.xlu0 1
    %467 = vperm.xlu0 %466, %v446
    %v468 = vpop.permute.xlu0 %467
    %470 = vset.pattern.permute.xlu0 1
    %471 = vperm.xlu0 %470, %v447
    %v472 = vpop.permute.xlu0 %471
    %v474 = vlaneseq
    %v475 = vshrl.u32 %v474, 7
    %v476 = vsub.s32 1, %v475
    %v477 = vrot.slane %v443, %v476
    %v478 = vmul.f32 %v468, %v477
    %v479 = vmul.f32 %v472, %v477
    %v480 = vadd.f32 %v464, %v478
    %v481 = vadd.f32 %v465, %v479
    %482 = vset.pattern.permute.xlu0 2
    %483 = vperm.xlu0 %482, %v446
    %v484 = vpop.permute.xlu0 %483
    %486 = vset.pattern.permute.xlu0 2
    %487 = vperm.xlu0 %486, %v447
    %v488 = vpop.permute.xlu0 %487
    %v490 = vlaneseq
    %v491 = vshrl.u32 %v490, 7
    %v492 = vsub.s32 2, %v491
    %v493 = vrot.slane %v443, %v492
    %v494 = vmul.f32 %v484, %v493
    %v495 = vmul.f32 %v488, %v493
    %v496 = vadd.f32 %v480, %v494
    %v497 = vadd.f32 %v481, %v495
    %498 = vset.pattern.permute.xlu0 3
    %499 = vperm.xlu0 %498, %v446
    %v500 = vpop.permute.xlu0 %499
    %502 = vset.pattern.permute.xlu0 3
    %503 = vperm.xlu0 %502, %v447
    %v504 = vpop.permute.xlu0 %503
    %v506 = vlaneseq
    %v507 = vshrl.u32 %v506, 7
    %v508 = vsub.s32 3, %v507
    %v509 = vrot.slane %v443, %v508
    %v510 = vmul.f32 %v500, %v509
    %v511 = vmul.f32 %v504, %v509
    %v512 = vadd.f32 %v496, %v510
    %v513 = vadd.f32 %v497, %v511
    %515 = vset.pattern.permute.xlu0 0
    %516 = vperm.xlu0 %515, %v444
    %v517 = vpop.permute.xlu0 %516
    %520 = vset.pattern.permute.xlu0 0
    %521 = vperm.xlu0 %520, %v445
    %v522 = vpop.permute.xlu0 %521
    %v524 = vadd.f32 %v517, %v512
    %v525 = vadd.f32 %v522, %v513
    %v526 = vmax.f32 %v524, 0.0
    %v527 = vmax.f32 %v525, 0.0
    %v528 = vld [vmem:[%s7] sm:$0xff]
    %v529 = vld [vmem:[%s7 + $0x8] sm:$0xff]
    %531 = vset.pattern.permute.xlu0 0
    %532 = vperm.xlu0 %531, %v528
    %v533 = vpop.permute.xlu0 %532
    %536 = vset.pattern.permute.xlu0 0
    %537 = vperm.xlu0 %536, %v529
    %v538 = vpop.permute.xlu0 %537
    %v540 = vmul.f32 %v526, %v533
    %v541 = vmul.f32 %v527, %v538
    %vm542 = vcmask 64512
    %v543 = vsel %vm542, %v540, 0.0
    %v544 = vsel %vm542, %v541, 0.0
    %v545 = vadd.f32 %v543, %v544
    %v546 = vrot.slane %v545, 4
    %v547 = vadd.f32 %v545, %v546
    %v548 = vrot.slane %v547, 2
    %v549 = vadd.f32 %v547, %v548
    %v550 = vrot.slane %v549, 1
    %v551 = vadd.f32 %v549, %v550
    %v552 = vld [vmem:[#allocation2] sm:$0x1]
    %554 = vset.pattern.permute.xlu0 0
    %555 = vperm.xlu0 %554, %v552
    %v556 = vpop.permute.xlu0 %555
    %v558 = vlaneseq
    %v559 = vshrl.u32 %v558, 7
    %v560 = vsub.s32 0, %v559
    %v561 = vrot.slane %v556, %v560
    %v562 = vadd.f32 %v551, %v561
    %vm563 = vcmask 57344
    %564 = vst.msk [vmem:[#allocation3] sm:$0x1] %vm563, %v562
    // Predicated region
    $region38: #{tpu_custom_call.1} parent=1 // pred_check
      _
    $region39: #{tpu_custom_call.1} parent=1 // pred_check_branch
      %566 = sbr.rel (0) target = $region41
    $region40: #{tpu_custom_call.1} parent=1 // pred_region
      %s568 = ssub.s32 16, 16
      %569 = vsyncadd [#allocation4], %s568
      %s571 = sshll.u32 [#allocation3], 4
      %s572 = int_to_ptr.vmem [resolvable:$true] %s571
      %574 = dma.vmem_to_hbm [thread:$0]  %s572, 16, %s9, [#allocation4]
    $region41: #{tpu_custom_call.1} parent=1 // pred_fallthru
      _
    // Predicated region
    $region42: #{tpu_custom_call.1} parent=1 // pred_check
      _
    $region43: #{tpu_custom_call.1} parent=1 // pred_check_branch
      %576 = sbr.rel (0) target = $region45
    $region44: #{tpu_custom_call.1} parent=1 // pred_region
      %577 = dma.done [#allocation4], 16
    $region45: #{tpu_custom_call.1} parent=1 // pred_fallthru
      _
    %578 = vsyncpa [#allocation4], 1

</llo_original>
